<compile_context>
chip_gen: v5e
topology: v5e:2x2
jax: 0.10.0
libtpu: 0.0.40
codegen_flags: <defaults>
</compile_context>

<pallas_src>
import functools
import math

import jax
import jax.numpy as jnp
from jax import lax
from jax.experimental import pallas as pl
from jax.experimental.pallas import tpu as pltpu

LANE = 128         # TPU lane width  (last-dim tiling)
SUBLANE = 8        # TPU sublane width (second-to-last-dim tiling)
_VMEM_LIMIT = 64 * 1024 * 1024


def _round_up(x, m):
    return (x + m - 1) // m * m


# ----------------------------------------------------------------------------
# Row-tiled fused linear kernel: y = x @ W + b   (bf16 MXU operands, f32 acc)
# ----------------------------------------------------------------------------
def _linear_kernel(x_ref, w_ref, b_ref, o_ref):
    xb = x_ref[...].astype(jnp.bfloat16)
    y = jnp.dot(xb, w_ref[...], preferred_element_type=jnp.float32)
    o_ref[...] = (y + b_ref[...]).astype(o_ref.dtype)


def pallas_linear(x, w, b, *, tile_m=256):
    """x: (M, Kin) f32, w: (Kin, N) bf16, b: (N,) f32 -> (M, N) f32."""
    M, Kin = x.shape
    N = w.shape[1]
    tile_m = min(tile_m, _round_up(M, SUBLANE))
    Mp = _round_up(M, tile_m)
    if Mp != M:
        x = jnp.pad(x, ((0, Mp - M), (0, 0)))
    out = pl.pallas_call(
        _linear_kernel,
        out_shape=jax.ShapeDtypeStruct((Mp, N), jnp.float32),
        grid=(Mp // tile_m,),
        in_specs=[pl.BlockSpec((tile_m, Kin), lambda i: (i, 0)),
                  pl.BlockSpec((Kin, N), lambda i: (0, 0)),
                  pl.BlockSpec((1, N), lambda i: (0, 0))],
        out_specs=pl.BlockSpec((tile_m, N), lambda i: (i, 0)),
        compiler_params=pltpu.CompilerParams(
            dimension_semantics=("parallel",),
            vmem_limit_bytes=_VMEM_LIMIT),
    )(x, w, b.reshape(1, -1))
    return out[:M]


# ----------------------------------------------------------------------------
# Fused transformer kernel: grid = (batch_tiles, depth)
#   attention -> residual + LN1 -> MLP(ReLU) -> residual + LN2
# Activations for one batch tile stay resident in the output VMEM block across
# the whole depth sweep.
# ----------------------------------------------------------------------------
def _layernorm_padded(x, g, b, k_real, eps=1e-5):
    # Padded lanes of x are exactly zero, so sums over the padded width equal
    # sums over the real k_real features; variance via E[x^2] - mu^2.
    inv_k = 1.0 / float(k_real)
    mu = jnp.sum(x, axis=-1, keepdims=True) * inv_k
    var = jnp.sum(x * x, axis=-1, keepdims=True) * inv_k - mu * mu
    return (x - mu) * lax.rsqrt(var + eps) * g + b


def _block_kernel(x_ref, wq_ref, wk_ref, wv_ref, wu_ref, bu_ref,
                  g1_ref, be1_ref, w1_ref, b1_ref, w2_ref, b2_ref,
                  g2_ref, be2_ref, o_ref, attn_ref,
                  *, b_tile, t_pad, t_real, heads, kp, k_real):
    # Seed the resident activation buffer at the first layer of this tile.
    @pl.when(pl.program_id(1) == 0)
    def _():
        o_ref[...] = x_ref[...]

    bt = b_tile * t_pad
    x = o_ref[...]                                   # (bt, kp) f32, resident
    xb = x.astype(jnp.bfloat16)

    # QKV projections for all images in the tile at once (M = b_tile * t rows).
    q = jnp.dot(xb, wq_ref[0], preferred_element_type=jnp.float32)
    kk = jnp.dot(xb, wk_ref[0], preferred_element_type=jnp.float32)
    v = jnp.dot(xb, wv_ref[0], preferred_element_type=jnp.float32)

    scale = 1.0 / (float(k_real) ** 0.25)
    # Padded sequence positions must get zero attention weight.
    key_pos = lax.broadcasted_iota(jnp.int32, (1, 1, t_pad), 2)
    key_bias = jnp.where(key_pos < t_real, 0.0, -1e30).astype(jnp.float32)

    # Per-head attention, batched over the images of the tile.  Head outputs
    # land in one (bt, heads*kp) buffer so the unify projection is ONE matmul.
    for h in range(heads):
        sl = slice(h * kp, (h + 1) * kp)             # lane-aligned head slice
        qh = (q[:, sl] * scale).reshape(b_tile, t_pad, kp)
        kh = (kk[:, sl] * scale).reshape(b_tile, t_pad, kp)
        vh = v[:, sl].reshape(b_tile, t_pad, kp).astype(jnp.bfloat16)
        s = jnp.einsum("bqc,bsc->bqs", qh, kh,
                       preferred_element_type=jnp.float32) + key_bias
        s = s - jnp.max(s, axis=-1, keepdims=True)
        p = jnp.exp(s)
        p = p * pl.reciprocal(jnp.sum(p, axis=-1, keepdims=True), approx=True)
        oh = jnp.einsum("bqs,bsc->bqc", p.astype(jnp.bfloat16), vh,
                        preferred_element_type=jnp.float32)
        attn_ref[:, sl] = oh.reshape(bt, kp).astype(jnp.bfloat16)

    attn = jnp.dot(attn_ref[...], wu_ref[0],
                   preferred_element_type=jnp.float32) + bu_ref[0]

    # Residual + LayerNorm1 (f32 statistics).
    y = _layernorm_padded(attn + x, g1_ref[0], be1_ref[0], k_real)

    # MLP: Linear(k, 4k) -> ReLU -> Linear(4k, k), bf16 MXU operands.
    hdn = jnp.dot(y.astype(jnp.bfloat16), w1_ref[0],
                  preferred_element_type=jnp.float32) + b1_ref[0]
    hdn = jnp.maximum(hdn, 0.0)
    m = jnp.dot(hdn.astype(jnp.bfloat16), w2_ref[0],
                preferred_element_type=jnp.float32) + b2_ref[0]

    # Residual + LayerNorm2 -> write back to the resident activation buffer.
    o_ref[...] = _layernorm_padded(m + y, g2_ref[0], be2_ref[0], k_real)


_BLOCK_PARAM_NAMES = ("WQ", "WK", "WV", "WU", "BU", "G1", "BE1",
                      "W1", "B1", "W2", "B2", "G2", "BE2")


def _transformer(x_flat, packed, *, b, b_tile, t_pad, t_real):
    KP, heads, k, depth = packed["KP"], packed["heads"], packed["k"], packed["depth"]
    HKP = heads * KP
    bt_tile = b_tile * t_pad

    kernel = functools.partial(_block_kernel, b_tile=b_tile, t_pad=t_pad,
                               t_real=t_real, heads=heads, kp=KP, k_real=k)

    def wspec(arr):
        nd = arr.ndim
        return pl.BlockSpec((1,) + arr.shape[1:],
                            lambda bi, d: (d,) + (0,) * (nd - 1))

    in_specs = ([pl.BlockSpec((bt_tile, KP), lambda bi, d: (bi, 0))]
                + [wspec(packed[n]) for n in _BLOCK_PARAM_NAMES])

    return pl.pallas_call(
        kernel,
        out_shape=jax.ShapeDtypeStruct((b * t_pad, KP), jnp.float32),
        grid=(b // b_tile, depth),
        in_specs=in_specs,
        out_specs=pl.BlockSpec((bt_tile, KP), lambda bi, d: (bi, 0)),
        scratch_shapes=[pltpu.VMEM((bt_tile, HKP), jnp.bfloat16)],
        compiler_params=pltpu.CompilerParams(
            # Batch tiles can shard across v7x's two TensorCores; the depth axis
            # carries the resident activations, so it must be "arbitrary".
            dimension_semantics=("parallel", "arbitrary"),
            vmem_limit_bytes=_VMEM_LIMIT),
    )(x_flat, *(packed[n] for n in _BLOCK_PARAM_NAMES))


# ----------------------------------------------------------------------------
# Classification head kernel: Linear -> GELU(exact, erf) -> Linear
# ----------------------------------------------------------------------------
def _head_kernel(x_ref, w1_ref, b1_ref, w2_ref, b2_ref, o_ref):
    xb = x_ref[...].astype(jnp.bfloat16)
    h = jnp.dot(xb, w1_ref[...], preferred_element_type=jnp.float32) + b1_ref[...]
    h = 0.5 * h * (1.0 + lax.erf(h * (1.0 / math.sqrt(2.0))))   # exact GELU
    o = jnp.dot(h.astype(jnp.bfloat16), w2_ref[...],
                preferred_element_type=jnp.float32) + b2_ref[...]
    o_ref[...] = o.astype(o_ref.dtype)


def pallas_mlp_head(x, w1, b1, w2, b2):
    b = x.shape[0]
    ncp = w2.shape[1]
    return pl.pallas_call(
        _head_kernel,
        out_shape=jax.ShapeDtypeStruct((b, ncp), jnp.float32),
        in_specs=[pl.BlockSpec(memory_space=pltpu.MemorySpace.VMEM)] * 5,
        out_specs=pl.BlockSpec(memory_space=pltpu.MemorySpace.VMEM),
        compiler_params=pltpu.CompilerParams(vmem_limit_bytes=_VMEM_LIMIT),
    )(x, w1, b1, w2, b2)


# ----------------------------------------------------------------------------
# Parameter construction (deterministic, original PyTorch shapes) and packing
# into lane-padded, depth-stacked, bf16 device layout.
# ----------------------------------------------------------------------------
def init_params(key, *, image_size, patch_size, num_classes, k, depth, heads,
                mlp_dim, channels):
    num_patches = (image_size // patch_size) ** 2
    patch_dim = channels * patch_size ** 2
    keys = iter(jax.random.split(key, 64))
    nrm = lambda shape, s=0.02: (s * jax.random.normal(next(keys), shape)).astype(jnp.float32)

    params = {
        "patch_w": nrm((patch_dim, k)),
        "patch_b": jnp.zeros((k,), jnp.float32),
        "cls_token": nrm((1, 1, k), 1.0),
        "pos_embedding": nrm((1, num_patches + 1, k), 1.0),
        "head_w1": nrm((k, mlp_dim)),
        "head_b1": jnp.zeros((mlp_dim,), jnp.float32),
        "head_w2": nrm((mlp_dim, num_classes)),
        "head_b2": jnp.zeros((num_classes,), jnp.float32),
        "blocks": [],
    }
    for _ in range(depth):
        params["blocks"].append({
            "wq": nrm((k, k * heads)), "wk": nrm((k, k * heads)), "wv": nrm((k, k * heads)),
            "wu": nrm((k * heads, k)), "bu": jnp.zeros((k,), jnp.float32),
            "g1": jnp.ones((k,), jnp.float32), "be1": jnp.zeros((k,), jnp.float32),
            "w1": nrm((k, 4 * k)), "b1": jnp.zeros((4 * k,), jnp.float32),
            "w2": nrm((4 * k, k)), "b2": jnp.zeros((k,), jnp.float32),
            "g2": jnp.ones((k,), jnp.float32), "be2": jnp.zeros((k,), jnp.float32),
        })
    return params


def pack_params(params, *, heads):
    patch_dim, k = params["patch_w"].shape
    mlp_dim = params["head_w1"].shape[1]
    num_classes = params["head_w2"].shape[1]
    depth = len(params["blocks"])

    KP = _round_up(k, LANE)            # padded embedding dim
    HP = _round_up(4 * k, LANE)        # padded MLP hidden dim
    PDP = _round_up(patch_dim, LANE)   # padded patch dim
    MLPD = _round_up(mlp_dim, LANE)    # padded head hidden dim
    NCP = _round_up(num_classes, LANE)  # padded class dim

    def pad2(a, r, c):
        return jnp.pad(a, ((0, r - a.shape[0]), (0, c - a.shape[1])))

    def pad_last(a, n):
        widths = [(0, 0)] * (a.ndim - 1) + [(0, n - a.shape[-1])]
        return jnp.pad(a, widths)

    def per_head_cols(w):  # (k, heads*k) -> (KP, heads*KP), per-head blocks
        return jnp.concatenate(
            [pad2(w[:, h * k:(h + 1) * k], KP, KP) for h in range(heads)], axis=1)

    def per_head_rows(w):  # (heads*k, k) -> (heads*KP, KP), per-head blocks
        return jnp.concatenate(
            [pad2(w[h * k:(h + 1) * k, :], KP, KP) for h in range(heads)], axis=0)

    blocks = params["blocks"]
    stack = lambda fn, name: jnp.stack([fn(blk[name]) for blk in blocks])
    vec = lambda n: (lambda a: pad_last(a, n).reshape(1, -1))

    return dict(
        KP=KP, HP=HP, PDP=PDP, MLPD=MLPD, NCP=NCP,
        heads=heads, k=k, depth=depth, num_classes=num_classes,
        patch_w=pad2(params["patch_w"], PDP, KP).astype(jnp.bfloat16),
        patch_b=pad_last(params["patch_b"], KP),
        cls_token=pad_last(params["cls_token"], KP),
        pos_embedding=pad_last(params["pos_embedding"], KP),
        head_w1=pad2(params["head_w1"], KP, MLPD).astype(jnp.bfloat16),
        head_b1=pad_last(params["head_b1"], MLPD).reshape(1, -1),
        head_w2=pad2(params["head_w2"], MLPD, NCP).astype(jnp.bfloat16),
        head_b2=pad_last(params["head_b2"], NCP).reshape(1, -1),
        WQ=stack(per_head_cols, "wq").astype(jnp.bfloat16),
        WK=stack(per_head_cols, "wk").astype(jnp.bfloat16),
        WV=stack(per_head_cols, "wv").astype(jnp.bfloat16),
        WU=stack(per_head_rows, "wu").astype(jnp.bfloat16),
        BU=stack(vec(KP), "bu"),
        G1=stack(vec(KP), "g1"),
        BE1=stack(vec(KP), "be1"),
        W1=stack(lambda a: pad2(a, KP, HP), "w1").astype(jnp.bfloat16),
        B1=stack(vec(HP), "b1"),
        W2=stack(lambda a: pad2(a, HP, KP), "w2").astype(jnp.bfloat16),
        B2=stack(vec(KP), "b2"),
        G2=stack(vec(KP), "g2"),
        BE2=stack(vec(KP), "be2"),
    )


# ----------------------------------------------------------------------------
# Forward pass
# ----------------------------------------------------------------------------
def rearrange_patches(img, p):
    # 'b c (h p1) (w p2) -> b (h w) (p1 p2 c)'
    b, c, H, W = img.shape
    h, w = H // p, W // p
    x = img.reshape(b, c, h, p, w, p)
    x = jnp.transpose(x, (0, 2, 4, 3, 5, 1))        # (b, h, w, p1, p2, c)
    return x.reshape(b, h * w, p * p * c)


def vision_transformer_forward(img, packed, *, patch_size, b_tile=8):
    b = img.shape[0]
    KP, PDP = packed["KP"], packed["PDP"]
    num_classes = packed["num_classes"]

    # 1. image -> patches (pure data movement, stays in XLA)
    patches = rearrange_patches(img, patch_size)            # (b, np, patch_dim)
    npatch, pd = patches.shape[1], patches.shape[2]
    x2 = patches.reshape(b * npatch, pd)
    x2 = jnp.pad(x2, ((0, 0), (0, PDP - pd)))               # lane-dense K dim

    # 2. patch embedding (row-tiled Pallas matmul, bf16 on the MXU)
    emb = pallas_linear(x2, packed["patch_w"], packed["patch_b"])
    emb = emb.reshape(b, npatch, KP)

    # 3./4. cls token + positional embedding (glue)
    cls = jnp.broadcast_to(packed["cls_token"], (b, 1, KP))
    seq = jnp.concatenate([cls, emb], axis=1) + packed["pos_embedding"]

    # Pad the sequence to a sublane multiple; padded rows are zero and their
    # keys are masked out of the softmax inside the kernel.
    t = npatch + 1
    t_pad = _round_up(t, SUBLANE)
    seq = jnp.pad(seq, ((0, 0), (0, t_pad - t), (0, 0)))

    bt = min(b_tile, b)
    while b % bt:
        bt -= 1

    # 5. fused transformer: whole depth inside one pallas_call, activations
    #    resident in VMEM across layers.
    y = _transformer(seq.reshape(b * t_pad, KP), packed,
                     b=b, b_tile=bt, t_pad=t_pad, t_real=t)
    y = y.reshape(b, t_pad, KP)

    # 6./7. cls token -> fused MLP head, then drop the class padding.
    logits = pallas_mlp_head(y[:, 0, :], packed["head_w1"], packed["head_b1"],
                             packed["head_w2"], packed["head_b2"])
    return logits[:, :num_classes]


if __name__ == "__main__":
    cfg = dict(image_size=16, patch_size=4, num_classes=10,
               k=32, depth=2, heads=2, mlp_dim=32, channels=4)

    key = jax.random.PRNGKey(0)
    pkey, xkey = jax.random.split(key)
    params = init_params(pkey, **cfg)
    packed = pack_params(params, heads=cfg["heads"])

    img = jax.random.normal(xkey, (2, cfg["channels"], cfg["image_size"],
                                   cfg["image_size"]), dtype=jnp.float32)

    logits = vision_transformer_forward(img, packed, patch_size=cfg["patch_size"])
    logits = jax.block_until_ready(logits)

    assert logits.shape == (2, cfg["num_classes"])
    assert bool(jnp.all(jnp.isfinite(logits)))
    print("KERNEL_OK")
</pallas_src>

<mosaic_0001>
module attributes {stable_mosaic.version = 11 : i64} {
  func.func @_linear_kernel(%arg0: i32, %arg1: memref<32x128xf32, #tpu.memory_space<vmem>>, %arg2: memref<128x128xbf16, #tpu.memory_space<vmem>>, %arg3: memref<1x128xf32, #tpu.memory_space<vmem>>, %arg4: memref<32x128xf32, #tpu.memory_space<vmem>>) attributes {dimension_semantics = [#tpu.dimension_semantics<parallel>], iteration_bounds = array<i64: 1>, scalar_prefetch = 0 : i64, scratch_operands = 0 : i64, tpu.core_type = #tpu.core_type<tc>, window_params = [{transform_indices = @transform_0, window_bounds = array<i64: 32, 128>}, {pipeline_mode = #tpu.pipeline_mode<synchronous>, transform_indices = @transform_1, window_bounds = array<i64: 128, 128>}, {pipeline_mode = #tpu.pipeline_mode<synchronous>, transform_indices = @transform_2, window_bounds = array<i64: 1, 128>}, {transform_indices = @transform_3, window_bounds = array<i64: 32, 128>}]} {
    %c0 = arith.constant 0 : index
    %c0_0 = arith.constant 0 : index
    %0 = vector.load %arg1[%c0, %c0_0] : memref<32x128xf32, #tpu.memory_space<vmem>>, vector<32x128xf32>
    %1 = arith.truncf %0 : vector<32x128xf32> to vector<32x128xbf16>
    %c0_1 = arith.constant 0 : index
    %c0_2 = arith.constant 0 : index
    %2 = vector.load %arg2[%c0_1, %c0_2] : memref<128x128xbf16, #tpu.memory_space<vmem>>, vector<128x128xbf16>
    %cst = arith.constant dense<0.000000e+00> : vector<32x128xf32>
    %3 = tpu.matmul %1, %2, %cst {dimension_numbers = #tpu.dot_dimension_numbers<[1], [0], [0], [1], [0, 0, 1, 1], [], []>} : vector<32x128xbf16>, vector<128x128xbf16>, vector<32x128xf32> -> vector<32x128xf32>
    %c0_3 = arith.constant 0 : index
    %c0_4 = arith.constant 0 : index
    %4 = vector.load %arg3[%c0_3, %c0_4] : memref<1x128xf32, #tpu.memory_space<vmem>>, vector<1x128xf32>
    %5 = vector.broadcast %4 : vector<1x128xf32> to vector<32x128xf32>
    %6 = arith.addf %3, %5 : vector<32x128xf32>
    %c0_5 = arith.constant 0 : index
    %c0_6 = arith.constant 0 : index
    %7 = vector.load %arg4[%c0_5, %c0_6] : memref<32x128xf32, #tpu.memory_space<vmem>>, vector<32x128xf32>
    tpu.vector_store %arg4[%c0_5, %c0_6], %6 {strides = array<i32>} : memref<32x128xf32, #tpu.memory_space<vmem>>, vector<32x128xf32>,
    return
  }
  func.func @transform_0(%arg0: i32) -> (i32, i32) {
    %c0_i32 = arith.constant 0 : i32
    %c0_i32_0 = arith.constant 0 : i32
    return %arg0, %c0_i32 : i32, i32
  }
  func.func @transform_1(%arg0: i32) -> (i32, i32) {
    %c0_i32 = arith.constant 0 : i32
    %c0_i32_0 = arith.constant 0 : i32
    %c0_i32_1 = arith.constant 0 : i32
    return %c0_i32, %c0_i32_0 : i32, i32
  }
  func.func @transform_2(%arg0: i32) -> (i32, i32) {
    %c0_i32 = arith.constant 0 : i32
    %c0_i32_0 = arith.constant 0 : i32
    %c0_i32_1 = arith.constant 0 : i32
    return %c0_i32, %c0_i32_0 : i32, i32
  }
  func.func @transform_3(%arg0: i32) -> (i32, i32) {
    %c0_i32 = arith.constant 0 : i32
    %c0_i32_0 = arith.constant 0 : i32
    return %arg0, %c0_i32 : i32, i32
  }
}

</mosaic_0001>

<llo_original>
// kernel: tpu_custom_call.1
$region0: #{tpu_custom_call.1}
  #allocation0 [shape = 'u32[]', space=smem, size = 0x4, offset = 0x4, fixed_abs, tag = 'smem constant byte address 0x4 - core index']
  #allocation1 [shape = 'u32[72,128]{1,0:T(1,128)}', space=vmem, size = 0x9000, scoped, tag = 'internal scratch']
  %s0 = inlined_call_operand.hbm [shape: f32[32,128], index: 0, kind: input, shape index: {}]
  %s1 = inlined_call_operand.hbm [shape: bf16[128,128], index: 1, kind: input, shape index: {}]
  %s2 = inlined_call_operand.vmem [shape: f32[1,128], index: 2, kind: input, shape index: {}]
  %s3 = inlined_call_operand.hbm [shape: f32[32,128], index: 3, kind: output, shape index: {}]
  %s4 = sld [smem:[#allocation0]]
  $region30: #{tpu_custom_call.1} parent=0
    _
  %s6 = ssub.s32 1, %s4
  %s7 = scalar_select 0, %s6, %s4
  $region1: #{tpu_custom_call.1} parent=0
    #allocation2 [shape = 'u8[16384]{0}', space=vmem, size = 0x4000, scoped, tag = 'input window, operand 0, single buffered']
    #allocation3 [shape = 's32[1]{0}', space=sflag, size = 0x4, scoped, tag = 'scoped memory for tpu_custom_call.1']
    #allocation4 [shape = 's32[1]{0}', space=sflag, size = 0x4, scoped, tag = 'scoped memory for tpu_custom_call.1']
    #allocation5 [shape = 'u8[32768]{0}', space=vmem, size = 0x8000, scoped, tag = 'input window, operand 1, single buffered']
    #allocation6 [shape = 's32[1]{0}', space=sflag, size = 0x4, scoped, tag = 'scoped memory for tpu_custom_call.1']
    #allocation7 [shape = 'u8[16384]{0}', space=vmem, size = 0x4000, scoped, tag = 'output window, operand 0, single buffered']
    %8 = vsyncpa [#allocation3], 0
    %9 = vsyncpa [#allocation6], 0
    %10 = vsyncpa [#allocation4], 0
    // Predicated region
    $region2: #{tpu_custom_call.1} parent=1 // pred_check
      _
    $region3: #{tpu_custom_call.1} parent=1 // pred_check_branch
      %12 = sbr.rel (0) target = $region5
    $region4: #{tpu_custom_call.1} parent=1 // pred_region
      %14 = vsyncadd [#allocation3], 0
      %s15 = sshll.u32 %s0, 4
      %s16 = int_to_ptr.hbm [resolvable:$true] %s15
      %s17 = sshll.u32 [#allocation2], 4
      %s18 = int_to_ptr.vmem [resolvable:$true] %s17
      %23 = dma.hbm_to_vmem [thread:$0]  %s16, 512, %s18, [#allocation3], 128, 128, 8
    $region5: #{tpu_custom_call.1} parent=1 // pred_fallthru
      _
    // Predicated region
    $region6: #{tpu_custom_call.1} parent=1 // pred_check
      _
    $region7: #{tpu_custom_call.1} parent=1 // pred_check_branch
      %25 = sbr.rel (0) target = $region9
    $region8: #{tpu_custom_call.1} parent=1 // pred_region
      %27 = vsyncadd [#allocation6], 0
      %s28 = sshll.u32 %s1, 4
      %s29 = int_to_ptr.hbm [resolvable:$true] %s28
      %s30 = sshll.u32 [#allocation5], 4
      %s31 = int_to_ptr.vmem [resolvable:$true] %s30
      %36 = dma.hbm_to_vmem [thread:$0]  %s29, 1024, %s31, [#allocation6], 64, 64, 4
    $region9: #{tpu_custom_call.1} parent=1 // pred_fallthru
      _
    // Predicated region
    $region10: #{tpu_custom_call.1} parent=1 // pred_check
      _
    $region11: #{tpu_custom_call.1} parent=1 // pred_check_branch
      %38 = sbr.rel (0) target = $region13
    $region12: #{tpu_custom_call.1} parent=1 // pred_region
      _
    $region13: #{tpu_custom_call.1} parent=1 // pred_fallthru
      _
    // Predicated region
    $region14: #{tpu_custom_call.1} parent=1 // pred_check
      _
    $region15: #{tpu_custom_call.1} parent=1 // pred_check_branch
      %40 = sbr.rel (0) target = $region17
    $region16: #{tpu_custom_call.1} parent=1 // pred_region
      %42 = dma.done [#allocation3], 512
    $region17: #{tpu_custom_call.1} parent=1 // pred_fallthru
      _
    // Predicated region
    $region18: #{tpu_custom_call.1} parent=1 // pred_check
      _
    $region19: #{tpu_custom_call.1} parent=1 // pred_check_branch
      %44 = sbr.rel (0) target = $region21
    $region20: #{tpu_custom_call.1} parent=1 // pred_region
      %46 = dma.done [#allocation6], 1024
    $region21: #{tpu_custom_call.1} parent=1 // pred_fallthru
      _
    %v47 = vld [vmem:[#allocation2] sm:$0xff]
    %v48 = vld [vmem:[#allocation2 + $0x8] sm:$0xff]
    %v49 = vld [vmem:[#allocation2 + $0x10] sm:$0xff]
    %v50 = vld [vmem:[#allocation2 + $0x18] sm:$0xff]
    %v51 = vpack.c.bf16 %v48, %v47
    %v52 = vpack.c.bf16 %v50, %v49
    %v53 = vld [vmem:[#allocation5] sm:$0xf]
    %v54 = vld [vmem:[#allocation5 + $0x4] sm:$0xf]
    %v55 = vld [vmem:[#allocation5 + $0x8] sm:$0xf]
    %v56 = vld [vmem:[#allocation5 + $0xc] sm:$0xf]
    %v57 = vld [vmem:[#allocation5 + $0x10] sm:$0xf]
    %v58 = vld [vmem:[#allocation5 + $0x14] sm:$0xf]
    %v59 = vld [vmem:[#allocation5 + $0x18] sm:$0xf]
    %v60 = vld [vmem:[#allocation5 + $0x1c] sm:$0xf]
    %v61 = vld [vmem:[#allocation5 + $0x20] sm:$0xf]
    %v62 = vld [vmem:[#allocation5 + $0x24] sm:$0xf]
    %v63 = vld [vmem:[#allocation5 + $0x28] sm:$0xf]
    %v64 = vld [vmem:[#allocation5 + $0x2c] sm:$0xf]
    %v65 = vld [vmem:[#allocation5 + $0x30] sm:$0xf]
    %v66 = vld [vmem:[#allocation5 + $0x34] sm:$0xf]
    %v67 = vld [vmem:[#allocation5 + $0x38] sm:$0xf]
    %v68 = vld [vmem:[#allocation5 + $0x3c] sm:$0xf]
    %v69 = vld [vmem:[%s2] sm:$0x1]
    %v71 = vperm.slane %v69, 0
    %v89 = vunpack.c.l.b16 %v53
    %v90 = vunpack.c.l.b16 %v54
    %v91 = vunpack.c.l.b16 %v55
    %v92 = vunpack.c.l.b16 %v56
    %v93 = vunpack.c.l.b16 %v57
    %v94 = vunpack.c.l.b16 %v58
    %v95 = vunpack.c.l.b16 %v59
    %v96 = vunpack.c.l.b16 %v60
    %v97 = vunpack.c.l.b16 %v61
    %v98 = vunpack.c.l.b16 %v62
    %v99 = vunpack.c.l.b16 %v63
    %v100 = vunpack.c.l.b16 %v64
    %v101 = vunpack.c.l.b16 %v65
    %v102 = vunpack.c.l.b16 %v66
    %v103 = vunpack.c.l.b16 %v67
    %v104 = vunpack.c.l.b16 %v68
    %v105 = vpack.c.b16 %v90, %v89
    %v106 = vpack.c.b16 %v92, %v91
    %v107 = vpack.c.b16 %v94, %v93
    %v108 = vpack.c.b16 %v96, %v95
    %v109 = vpack.c.b16 %v98, %v97
    %v110 = vpack.c.b16 %v100, %v99
    %v111 = vpack.c.b16 %v102, %v101
    %v112 = vpack.c.b16 %v104, %v103
    %121 = vmatpush.bf16.msra.mxu0 %v112
    %122 = vmatpush.bf16.msra.mxu0 %v111
    %123 = vmatpush.bf16.msra.mxu0 %v110
    %124 = vmatpush.bf16.msra.mxu0 %v109
    %125 = vmatpush.bf16.msra.mxu0 %v108
    %126 = vmatpush.bf16.msra.mxu0 %v107
    %127 = vmatpush.bf16.msra.mxu0 %v106
    %128 = vmatpush.bf16.msra.mxu0 %v105
    %129 = vmatmul.bf16.gmra.mxu0 %v51
    %v130 = vpop.f32.mrf.mxu0
    %v131 = vadd.f32 %v71, %v130
    %v132 = vpop.f32.mrf.mxu0
    %v133 = vadd.f32 %v71, %v132
    %134 = vmatmul.bf16.gmra.mxu0 %v52
    %v135 = vpop.f32.mrf.mxu0
    %v136 = vadd.f32 %v71, %v135
    %v137 = vpop.f32.mrf.mxu0
    %v138 = vadd.f32 %v71, %v137
    %139 = vdwg.mxu0
    %140 = vst [vmem:[#allocation7] sm:$0xff] %v131
    %141 = vst [vmem:[#allocation7 + $0x8] sm:$0xff] %v133
    %142 = vst [vmem:[#allocation7 + $0x10] sm:$0xff] %v136
    %143 = vst [vmem:[#allocation7 + $0x18] sm:$0xff] %v138
    // Predicated region
    $region22: #{tpu_custom_call.1} parent=1 // pred_check
      _
    $region23: #{tpu_custom_call.1} parent=1 // pred_check_branch
      %145 = sbr.rel (0) target = $region25
    $region24: #{tpu_custom_call.1} parent=1 // pred_region
      %147 = vsyncadd [#allocation4], 0
      %s148 = sshll.u32 [#allocation7], 4
      %s149 = int_to_ptr.vmem [resolvable:$true] %s148
      %s150 = sshll.u32 %s3, 4
      %s151 = int_to_ptr.hbm [resolvable:$true] %s150
      %156 = dma.vmem_to_hbm [thread:$0]  %s149, 512, %s151, [#allocation4], 128, 128, 8
    $region25: #{tpu_custom_call.1} parent=1 // pred_fallthru
      _
    // Predicated region
    $region26: #{tpu_custom_call.1} parent=1 // pred_check
      _
    $region27: #{tpu_custom_call.1} parent=1 // pred_check_branch
      %158 = sbr.rel (0) target = $region29
    $region28: #{tpu_custom_call.1} parent=1 // pred_region
      %160 = dma.done [#allocation4], 512
    $region29: #{tpu_custom_call.1} parent=1 // pred_fallthru
      _
    %161 = vsyncpa [#allocation3], 1
    %162 = vsyncpa [#allocation6], 1
    %163 = vsyncpa [#allocation4], 1

</llo_original>
